<compile_context>
chip_gen: v6e
topology: v6e:2x2x1
jax: 0.10.0
libtpu: 0.0.40
codegen_flags: <defaults>
</compile_context>

<pallas_src>
from types import SimpleNamespace

import numpy as np
import jax
import jax.numpy as jnp
from jax.experimental import pallas as pl
from jax.experimental.pallas import tpu as pltpu

_LOG_2PI = float(np.log(2.0 * np.pi))


# ----------------------------- Pallas kernels ------------------------------

def _entropy_kernel(x_ref, mean_ref, nhg2_ref, const_ref, out_ref):
    """x: (T, D, tm) f32, mean: (B, T, D, 1), nhg2 = -0.5/gamma^2: (B, T, 1),
    const = -D*log(gamma) - D/2*log(2pi): (B, T, 1)
    ->  out: (T, tm) = log(mean_b exp(logpdf_b))."""
    x = x_ref[...]                                      # (T, D, tm)
    num_comp = mean_ref.shape[0]
    acc = jnp.zeros(out_ref.shape, jnp.float32)         # (T, tm)
    # B is small & static -> statically unrolled.  For large B switch to a
    # lax.fori_loop (bounds live ranges / vreg pressure, esp. on v7x 64 MiB
    # VMEM) or reformulate the cross term as an einsum on the MXU.
    for b in range(num_comp):
        d = x - mean_ref[b]                             # (T, D, tm)
        ss = jnp.sum(d * d, axis=1)                     # (T, tm)   D-reduce once
        lp = const_ref[b] + nhg2_ref[b] * ss            # scale+const after reduce
        acc = acc + jnp.exp(lp)                         # EUP
    # exp -> mean(components) -> log, matching torch exactly (no max guard).
    out_ref[...] = jnp.log(acc * (1.0 / num_comp))


def _congestion_kernel(x_ref, y_ref, out_ref):
    """x, y: (T, D, tm) -> out: (T, tm) = 2 / (||x - y||_D^2 + 1)."""
    dd = x_ref[...] - y_ref[...]
    dist = jnp.sum(dd * dd, axis=1)
    out_ref[...] = 2.0 / (dist + 1.0)


# ------------------------------- wrappers ----------------------------------

def _choose_tile_m(M, row_bytes_per_stream, n_streams, *,
                   max_tile=2048, vmem_budget=24 << 20):
    """Pick a lane-tile (multiple of 128, VMEM-budgeted) and the padded M."""
    max_tile = max(128, (max_tile // 128) * 128)
    # double-buffered input streams dominate the VMEM footprint
    denom = max(1, row_bytes_per_stream * n_streams * 2)
    cap = max(128, ((vmem_budget // denom) // 128) * 128)
    tile = min(max_tile, cap)
    if M <= tile:
        return M, M            # single block spanning full M (legal even if ragged)
    m_pad = -(-M // tile) * tile
    return tile, m_pad


def entropy_cost(xt, t, gpath, *, tile_m_max=2048):
    """xt: (B, N, T, D), t: (T,) -> (B, N, T)."""
    B, N, T, D = xt.shape
    assert t.shape == (T,)
    mean_t = jax.lax.stop_gradient(gpath.mean(t)).astype(jnp.float32)    # (B,T,D)
    gamma_t = jax.lax.stop_gradient(gpath.gamma(t)).astype(jnp.float32)  # (B,T,1)

    # Wrapper-side precompute (O(B*T), negligible): broadcast-ready operands.
    mean_bc = mean_t[..., None]                                  # (B,T,D,1)
    nhg2_bc = -0.5 / (gamma_t * gamma_t)                         # (B,T,1)
    const_bc = -D * jnp.log(gamma_t) - 0.5 * D * _LOG_2PI        # (B,T,1)

    M = B * N
    # TODO(synk): keep xt in bfloat16 for the HBM->VMEM DMA once the caller's
    # accuracy budget allows it (halves bytes on this memory-bound path).
    x = xt.reshape(M, T, D).astype(jnp.float32)
    x_t = jnp.transpose(x, (1, 2, 0))                            # (T, D, M): M on lanes
    tile_m, m_pad = _choose_tile_m(M, T * D * 4, n_streams=1, max_tile=tile_m_max)
    if m_pad != M:
        x_t = jnp.pad(x_t, ((0, 0), (0, 0), (0, m_pad - M)))

    out = pl.pallas_call(
        _entropy_kernel,
        out_shape=jax.ShapeDtypeStruct((T, m_pad), jnp.float32),
        grid=(m_pad // tile_m,),
        in_specs=[
            pl.BlockSpec((T, D, tile_m), lambda i: (0, 0, i)),
            pl.BlockSpec((B, T, D, 1), lambda i: (0, 0, 0, 0)),   # constant block
            pl.BlockSpec((B, T, 1), lambda i: (0, 0, 0)),         # constant block
            pl.BlockSpec((B, T, 1), lambda i: (0, 0, 0)),         # constant block
        ],
        out_specs=pl.BlockSpec((T, tile_m), lambda i: (0, i)),
        compiler_params=pltpu.CompilerParams(
            dimension_semantics=("parallel",)),  # feeds both TCs on v7x when grid >= 2
    )(x_t, mean_bc, nhg2_bc, const_bc)
    return jnp.transpose(out[:, :M]).reshape(B, N, T)


def congestion_cost(xt, key, *, tile_m_max=2048):
    """xt: (*, T, D) -> (*, T)."""
    lead = xt.shape[:-2]
    T, D = xt.shape[-2:]
    M = int(np.prod(lead))
    x = xt.reshape(M, T, D).astype(jnp.float32)
    x_t = jnp.transpose(x, (1, 2, 0))                            # (T, D, M)
    perm = jax.random.permutation(key, M)   # torch.randperm equivalent (glue)
    # One XLA lane-gather on the already lane-dense slab.
    # TODO(synk): for very large M fuse this gather into the kernel
    # (PrefetchScalarGridSpec + per-row make_async_copy from pl.ANY) to remove
    # the extra HBM pass for y.
    y_t = jnp.take(x_t, perm, axis=2)
    tile_m, m_pad = _choose_tile_m(M, T * D * 4, n_streams=2, max_tile=tile_m_max)
    if m_pad != M:
        pad = ((0, 0), (0, 0), (0, m_pad - M))
        x_t = jnp.pad(x_t, pad)
        y_t = jnp.pad(y_t, pad)

    out = pl.pallas_call(
        _congestion_kernel,
        out_shape=jax.ShapeDtypeStruct((T, m_pad), jnp.float32),
        grid=(m_pad // tile_m,),
        in_specs=[
            pl.BlockSpec((T, D, tile_m), lambda i: (0, 0, i)),
            pl.BlockSpec((T, D, tile_m), lambda i: (0, 0, i)),
        ],
        out_specs=pl.BlockSpec((T, tile_m), lambda i: (0, i)),
        compiler_params=pltpu.CompilerParams(
            dimension_semantics=("parallel",)),
    )(x_t, y_t)
    return jnp.transpose(out[:, :M]).reshape(*lead, T)


def zero_cost_fn(x, *args):
    return jnp.zeros(x.shape[:-1], jnp.float32)


class GaussianPath:
    """Deterministic synthetic stand-in for gpath (provides mean(t), gamma(t))."""

    def __init__(self, mu0, mu1, sigma):
        self.mu0 = mu0          # (B, D)
        self.mu1 = mu1          # (B, D)
        self.sigma = float(sigma)

    def mean(self, t):          # (T,) -> (B, T, D)
        return ((1.0 - t)[None, :, None] * self.mu0[:, None, :]
                + t[None, :, None] * self.mu1[:, None, :])

    def gamma(self, t):         # (T,) -> (B, T, 1)
        B = self.mu0.shape[0]
        g = self.sigma * jnp.sqrt(t * (1.0 - t) + 0.1)
        return jnp.broadcast_to(g[None, :, None], (B, t.shape[0], 1))


class OpinionStateCost:
    def __init__(self, scfg):
        self.scfg = scfg

    def __call__(self, xt, t, gpath, key=None):
        T, D = xt.shape[-2:]
        scfg = self.scfg
        assert t.shape == (T,)
        V = zero_cost_fn(xt)
        if 'ent' in scfg.type and scfg.ent > 0:
            V = V + scfg.ent * entropy_cost(xt, t, gpath)
        elif 'cgst' in scfg.type and scfg.cgst > 0:
            V = V + scfg.cgst * congestion_cost(xt, key)
        assert V.shape == xt.shape[:-1]
        return V


# ---------------------------- pure-JAX reference ----------------------------

def _entropy_cost_ref(xt, t, gpath):
    B, N, T, D = xt.shape
    mean_t = gpath.mean(t)                      # (B, T, D)
    gamma_t = gpath.gamma(t)                    # (B, T, 1)
    x = xt[:, :, None, :, :]                    # (B, N, 1, T, D)
    mu = mean_t[None, None]                     # (1, 1, B, T, D)
    sig = gamma_t[None, None]                   # (1, 1, B, T, 1)
    z = (x - mu) / sig
    lp = (-0.5 * jnp.sum(z * z, -1)
          - D * jnp.log(sig[..., 0]) - 0.5 * D * _LOG_2PI)   # (B, N, B, T)
    pt = jnp.mean(jnp.exp(lp), axis=2)
    return jnp.log(pt)                          # (B, N, T)


def _congestion_cost_ref(xt, key):
    lead = xt.shape[:-2]
    T, D = xt.shape[-2:]
    x = xt.reshape(-1, T, D)
    y = x[jax.random.permutation(key, x.shape[0])]
    dd = x - y
    return (2.0 / (jnp.sum(dd * dd, -1) + 1.0)).reshape(*lead, T)


# ---------------------------------- main ------------------------------------

if __name__ == "__main__":
    key = jax.random.PRNGKey(0)
    k_x, k_mu0, k_mu1, k_perm, k_x2, k_perm2 = jax.random.split(key, 6)

    B, N, T, D = 2, 8, 8, 4
    xt = jax.random.normal(k_x, (B, N, T, D), jnp.float32)
    t = jnp.linspace(0.1, 0.9, T).astype(jnp.float32)
    gpath = GaussianPath(
        mu0=jax.random.normal(k_mu0, (B, D), jnp.float32),
        mu1=jax.random.normal(k_mu1, (B, D), jnp.float32),
        sigma=1.0,
    )

    scfg_ent = SimpleNamespace(type="ent", ent=0.5, cgst=0.0)
    scfg_cgst = SimpleNamespace(type="cgst", ent=0.0, cgst=1.5)

    # --- small shapes (single block, ragged lane dim) ---
    v_ent = OpinionStateCost(scfg_ent)(xt, t, gpath)
    v_cgst = OpinionStateCost(scfg_cgst)(xt, t, gpath, key=k_perm)
    jax.block_until_ready((v_ent, v_cgst))

    v_ent_ref = scfg_ent.ent * _entropy_cost_ref(xt, t, gpath)
    v_cgst_ref = scfg_cgst.cgst * _congestion_cost_ref(xt, k_perm)
    np.testing.assert_allclose(np.asarray(v_ent), np.asarray(v_ent_ref),
                               rtol=3e-4, atol=1e-4)
    np.testing.assert_allclose(np.asarray(v_cgst), np.asarray(v_cgst_ref),
                               rtol=1e-5, atol=1e-5)
    assert v_ent.shape == (B, N, T) and v_cgst.shape == (B, N, T)

    # --- larger M exercising multi-block grid + lane padding (tile_m=256) ---
    N2 = 300                                    # M = 600 -> padded to 768, grid=3
    xt2 = jax.random.normal(k_x2, (B, N2, T, D), jnp.float32)
    v_ent2 = entropy_cost(xt2, t, gpath, tile_m_max=256)
    v_cgst2 = congestion_cost(xt2, k_perm2, tile_m_max=256)
    jax.block_until_ready((v_ent2, v_cgst2))
    np.testing.assert_allclose(np.asarray(v_ent2),
                               np.asarray(_entropy_cost_ref(xt2, t, gpath)),
                               rtol=3e-4, atol=1e-4)
    np.testing.assert_allclose(np.asarray(v_cgst2),
                               np.asarray(_congestion_cost_ref(xt2, k_perm2)),
                               rtol=1e-5, atol=1e-5)
    assert v_ent2.shape == (B, N2, T) and v_cgst2.shape == (B, N2, T)

    print("KERNEL_OK")
</pallas_src>

<mosaic_0001>
module attributes {stable_mosaic.version = 11 : i64} {
  func.func @_entropy_kernel(%arg0: i32, %arg1: memref<8x4x16xf32, #tpu.memory_space<vmem>>, %arg2: memref<2x8x4x1xf32, #tpu.memory_space<vmem>>, %arg3: memref<2x8x1xf32, #tpu.memory_space<vmem>>, %arg4: memref<2x8x1xf32, #tpu.memory_space<vmem>>, %arg5: memref<8x16xf32, #tpu.memory_space<vmem>>) attributes {dimension_semantics = [#tpu.dimension_semantics<parallel>], iteration_bounds = array<i64: 1>, scalar_prefetch = 0 : i64, scratch_operands = 0 : i64, tpu.core_type = #tpu.core_type<tc>, window_params = [{transform_indices = @transform_0, window_bounds = array<i64: 8, 4, 16>}, {pipeline_mode = #tpu.pipeline_mode<synchronous>, transform_indices = @transform_1, window_bounds = array<i64: 2, 8, 4, 1>}, {pipeline_mode = #tpu.pipeline_mode<synchronous>, transform_indices = @transform_2, window_bounds = array<i64: 2, 8, 1>}, {pipeline_mode = #tpu.pipeline_mode<synchronous>, transform_indices = @transform_3, window_bounds = array<i64: 2, 8, 1>}, {transform_indices = @transform_4, window_bounds = array<i64: 8, 16>}]} {
    %c0 = arith.constant 0 : index
    %c0_0 = arith.constant 0 : index
    %c0_1 = arith.constant 0 : index
    %0 = vector.load %arg1[%c0, %c0_0, %c0_1] : memref<8x4x16xf32, #tpu.memory_space<vmem>>, vector<8x4x16xf32>
    %cst = arith.constant 0.000000e+00 : f32
    %1 = vector.broadcast %cst : f32 to vector<8x16xf32>
    %c0_2 = arith.constant 0 : index
    %c0_3 = arith.constant 0 : index
    %c0_4 = arith.constant 0 : index
    %c0_5 = arith.constant 0 : index
    %2 = vector.load %arg2[%c0_2, %c0_3, %c0_4, %c0_5] : memref<2x8x4x1xf32, #tpu.memory_space<vmem>>, vector<1x8x4x1xf32>
    %3 = vector.shape_cast %2 : vector<1x8x4x1xf32> to vector<8x4x1xf32>
    %4 = vector.broadcast %3 : vector<8x4x1xf32> to vector<8x4x16xf32>
    %5 = arith.subf %0, %4 : vector<8x4x16xf32>
    %6 = arith.mulf %5, %5 : vector<8x4x16xf32>
    %cst_6 = arith.constant dense<0.000000e+00> : vector<8x16xf32>
    %7 = vector.multi_reduction <add>, %6, %cst_6 [1] : vector<8x4x16xf32> to vector<8x16xf32>
    %c0_7 = arith.constant 0 : index
    %c0_8 = arith.constant 0 : index
    %c0_9 = arith.constant 0 : index
    %8 = vector.load %arg4[%c0_7, %c0_8, %c0_9] : memref<2x8x1xf32, #tpu.memory_space<vmem>>, vector<1x8x1xf32>
    %9 = vector.shape_cast %8 : vector<1x8x1xf32> to vector<8x1xf32>
    %c0_10 = arith.constant 0 : index
    %c0_11 = arith.constant 0 : index
    %c0_12 = arith.constant 0 : index
    %10 = vector.load %arg3[%c0_10, %c0_11, %c0_12] : memref<2x8x1xf32, #tpu.memory_space<vmem>>, vector<1x8x1xf32>
    %11 = vector.shape_cast %10 : vector<1x8x1xf32> to vector<8x1xf32>
    %12 = vector.broadcast %11 : vector<8x1xf32> to vector<8x16xf32>
    %13 = arith.mulf %12, %7 : vector<8x16xf32>
    %14 = vector.broadcast %9 : vector<8x1xf32> to vector<8x16xf32>
    %15 = arith.addf %14, %13 : vector<8x16xf32>
    %16 = math.exp %15 : vector<8x16xf32>
    %17 = arith.addf %1, %16 : vector<8x16xf32>
    %c1 = arith.constant 1 : index
    %c0_13 = arith.constant 0 : index
    %c0_14 = arith.constant 0 : index
    %c0_15 = arith.constant 0 : index
    %18 = vector.load %arg2[%c1, %c0_13, %c0_14, %c0_15] : memref<2x8x4x1xf32, #tpu.memory_space<vmem>>, vector<1x8x4x1xf32>
    %19 = vector.shape_cast %18 : vector<1x8x4x1xf32> to vector<8x4x1xf32>
    %20 = vector.broadcast %19 : vector<8x4x1xf32> to vector<8x4x16xf32>
    %21 = arith.subf %0, %20 : vector<8x4x16xf32>
    %22 = arith.mulf %21, %21 : vector<8x4x16xf32>
    %cst_16 = arith.constant dense<0.000000e+00> : vector<8x16xf32>
    %23 = vector.multi_reduction <add>, %22, %cst_16 [1] : vector<8x4x16xf32> to vector<8x16xf32>
    %c1_17 = arith.constant 1 : index
    %c0_18 = arith.constant 0 : index
    %c0_19 = arith.constant 0 : index
    %24 = vector.load %arg4[%c1_17, %c0_18, %c0_19] : memref<2x8x1xf32, #tpu.memory_space<vmem>>, vector<1x8x1xf32>
    %25 = vector.shape_cast %24 : vector<1x8x1xf32> to vector<8x1xf32>
    %c1_20 = arith.constant 1 : index
    %c0_21 = arith.constant 0 : index
    %c0_22 = arith.constant 0 : index
    %26 = vector.load %arg3[%c1_20, %c0_21, %c0_22] : memref<2x8x1xf32, #tpu.memory_space<vmem>>, vector<1x8x1xf32>
    %27 = vector.shape_cast %26 : vector<1x8x1xf32> to vector<8x1xf32>
    %28 = vector.broadcast %27 : vector<8x1xf32> to vector<8x16xf32>
    %29 = arith.mulf %28, %23 : vector<8x16xf32>
    %30 = vector.broadcast %25 : vector<8x1xf32> to vector<8x16xf32>
    %31 = arith.addf %30, %29 : vector<8x16xf32>
    %32 = math.exp %31 : vector<8x16xf32>
    %33 = arith.addf %17, %32 : vector<8x16xf32>
    %cst_23 = arith.constant 5.000000e-01 : f32
    %34 = vector.broadcast %cst_23 : f32 to vector<8x16xf32>
    %35 = arith.mulf %33, %34 : vector<8x16xf32>
    %36 = math.log %35 : vector<8x16xf32>
    %c0_24 = arith.constant 0 : index
    %c0_25 = arith.constant 0 : index
    %37 = vector.load %arg5[%c0_24, %c0_25] : memref<8x16xf32, #tpu.memory_space<vmem>>, vector<8x16xf32>
    tpu.vector_store %arg5[%c0_24, %c0_25], %36 {strides = array<i32>} : memref<8x16xf32, #tpu.memory_space<vmem>>, vector<8x16xf32>,
    return
  }
  func.func @transform_0(%arg0: i32) -> (i32, i32, i32) {
    %c0_i32 = arith.constant 0 : i32
    %c0_i32_0 = arith.constant 0 : i32
    %c0_i32_1 = arith.constant 0 : i32
    return %c0_i32, %c0_i32_0, %arg0 : i32, i32, i32
  }
  func.func @transform_1(%arg0: i32) -> (i32, i32, i32, i32) {
    %c0_i32 = arith.constant 0 : i32
    %c0_i32_0 = arith.constant 0 : i32
    %c0_i32_1 = arith.constant 0 : i32
    %c0_i32_2 = arith.constant 0 : i32
    %c0_i32_3 = arith.constant 0 : i32
    return %c0_i32, %c0_i32_0, %c0_i32_1, %c0_i32_2 : i32, i32, i32, i32
  }
  func.func @transform_2(%arg0: i32) -> (i32, i32, i32) {
    %c0_i32 = arith.constant 0 : i32
    %c0_i32_0 = arith.constant 0 : i32
    %c0_i32_1 = arith.constant 0 : i32
    %c0_i32_2 = arith.constant 0 : i32
    return %c0_i32, %c0_i32_0, %c0_i32_1 : i32, i32, i32
  }
  func.func @transform_3(%arg0: i32) -> (i32, i32, i32) {
    %c0_i32 = arith.constant 0 : i32
    %c0_i32_0 = arith.constant 0 : i32
    %c0_i32_1 = arith.constant 0 : i32
    %c0_i32_2 = arith.constant 0 : i32
    return %c0_i32, %c0_i32_0, %c0_i32_1 : i32, i32, i32
  }
  func.func @transform_4(%arg0: i32) -> (i32, i32) {
    %c0_i32 = arith.constant 0 : i32
    %c0_i32_0 = arith.constant 0 : i32
    return %c0_i32, %arg0 : i32, i32
  }
}

</mosaic_0001>

<llo_original>
// kernel: tpu_custom_call.1
$region0: #{tpu_custom_call.1}
  #allocation0 [shape = 'u32[]', space=smem, size = 0x4, offset = 0x4, fixed_abs, tag = 'smem constant byte address 0x4 - core index']
  #allocation1 [shape = 'u32[144,128]{1,0:T(1,128)}', space=vmem, size = 0x12000, scoped, tag = 'internal scratch']
  %s0 = inlined_call_operand.vmem [shape: f32[8,4,16], index: 0, kind: input, shape index: {}]
  %s1 = inlined_call_operand.vmem [shape: f32[2,8,4,1], index: 1, kind: input, shape index: {}]
  %s2 = inlined_call_operand.vmem [shape: f32[2,8,1], index: 2, kind: input, shape index: {}]
  %s3 = inlined_call_operand.vmem [shape: f32[2,8,1], index: 3, kind: input, shape index: {}]
  %s4 = inlined_call_operand.hbm [shape: f32[8,16], index: 4, kind: output, shape index: {}]
  %s5 = sld [smem:[#allocation0]]
  $region26: #{tpu_custom_call.1} parent=0
    _
  %s7 = ssub.s32 1, %s5
  %s8 = scalar_select 0, %s7, %s5
  $region1: #{tpu_custom_call.1} parent=0
    #allocation2 [shape = 'u8[4096]{0}', space=vmem, size = 0x1000, scoped, tag = 'output window, operand 0, single buffered']
    #allocation3 [shape = 's32[1]{0}', space=sflag, size = 0x4, scoped, tag = 'scoped memory for tpu_custom_call.1']
    %9 = vsyncpa [#allocation3], 0
    // Predicated region
    $region2: #{tpu_custom_call.1} parent=1 // pred_check
      _
    $region3: #{tpu_custom_call.1} parent=1 // pred_check_branch
      %11 = sbr.rel (0) target = $region5
    $region4: #{tpu_custom_call.1} parent=1 // pred_region
      _
    $region5: #{tpu_custom_call.1} parent=1 // pred_fallthru
      _
    // Predicated region
    $region6: #{tpu_custom_call.1} parent=1 // pred_check
      _
    $region7: #{tpu_custom_call.1} parent=1 // pred_check_branch
      %13 = sbr.rel (0) target = $region9
    $region8: #{tpu_custom_call.1} parent=1 // pred_region
      _
    $region9: #{tpu_custom_call.1} parent=1 // pred_fallthru
      _
    // Predicated region
    $region10: #{tpu_custom_call.1} parent=1 // pred_check
      _
    $region11: #{tpu_custom_call.1} parent=1 // pred_check_branch
      %15 = sbr.rel (0) target = $region13
    $region12: #{tpu_custom_call.1} parent=1 // pred_region
      _
    $region13: #{tpu_custom_call.1} parent=1 // pred_fallthru
      _
    // Predicated region
    $region14: #{tpu_custom_call.1} parent=1 // pred_check
      _
    $region15: #{tpu_custom_call.1} parent=1 // pred_check_branch
      %17 = sbr.rel (0) target = $region17
    $region16: #{tpu_custom_call.1} parent=1 // pred_region
      _
    $region17: #{tpu_custom_call.1} parent=1 // pred_fallthru
      _
    %v18 = vld [vmem:[%s0] sm:$0xf]
    %v19 = vld [vmem:[%s0 + $0x4] sm:$0xf]
    %v20 = vld [vmem:[%s0 + $0x8] sm:$0xf]
    %v21 = vld [vmem:[%s0 + $0xc] sm:$0xf]
    %v22 = vld [vmem:[%s0 + $0x10] sm:$0xf]
    %v23 = vld [vmem:[%s0 + $0x14] sm:$0xf]
    %v24 = vld [vmem:[%s0 + $0x18] sm:$0xf]
    %v25 = vld [vmem:[%s0 + $0x1c] sm:$0xf]
    %v26 = vld [vmem:[%s1] sm:$0xf]
    %v27 = vld [vmem:[%s1 + $0x4] sm:$0xf]
    %v28 = vld [vmem:[%s1 + $0x8] sm:$0xf]
    %v29 = vld [vmem:[%s1 + $0xc] sm:$0xf]
    %v30 = vld [vmem:[%s1 + $0x10] sm:$0xf]
    %v31 = vld [vmem:[%s1 + $0x14] sm:$0xf]
    %v32 = vld [vmem:[%s1 + $0x18] sm:$0xf]
    %v33 = vld [vmem:[%s1 + $0x1c] sm:$0xf]
    %35 = vset.pattern.permute.xlu0 0
    %36 = vperm.xlu0 %35, %v26
    %v37 = vpop.permute.xlu0 %36
    %40 = vset.pattern.permute.xlu0 0
    %41 = vperm.xlu0 %40, %v27
    %v42 = vpop.permute.xlu0 %41
    %45 = vset.pattern.permute.xlu0 0
    %46 = vperm.xlu0 %45, %v28
    %v47 = vpop.permute.xlu0 %46
    %50 = vset.pattern.permute.xlu0 0
    %51 = vperm.xlu0 %50, %v29
    %v52 = vpop.permute.xlu0 %51
    %55 = vset.pattern.permute.xlu0 0
    %56 = vperm.xlu0 %55, %v30
    %v57 = vpop.permute.xlu0 %56
    %60 = vset.pattern.permute.xlu0 0
    %61 = vperm.xlu0 %60, %v31
    %v62 = vpop.permute.xlu0 %61
    %65 = vset.pattern.permute.xlu0 0
    %66 = vperm.xlu0 %65, %v32
    %v67 = vpop.permute.xlu0 %66
    %70 = vset.pattern.permute.xlu0 0
    %71 = vperm.xlu0 %70, %v33
    %v72 = vpop.permute.xlu0 %71
    %v74 = vsub.f32 %v18, %v37
    %v75 = vsub.f32 %v19, %v42
    %v76 = vsub.f32 %v20, %v47
    %v77 = vsub.f32 %v21, %v52
    %v78 = vsub.f32 %v22, %v57
    %v79 = vsub.f32 %v23, %v62
    %v80 = vsub.f32 %v24, %v67
    %v81 = vsub.f32 %v25, %v72
    %v82 = vmul.f32 %v74, %v74
    %v83 = vmul.f32 %v75, %v75
    %v84 = vmul.f32 %v76, %v76
    %v85 = vmul.f32 %v77, %v77
    %v86 = vmul.f32 %v78, %v78
    %v87 = vmul.f32 %v79, %v79
    %v88 = vmul.f32 %v80, %v80
    %v89 = vmul.f32 %v81, %v81
    %vm90 = vcmask 125952
    %v91 = vsel %vm90, %v82, 0.0
    %v92 = vrot.slane %v91, 4
    %v93 = vadd.f32 %v91, %v92
    %v94 = vrot.slane %v93, 2
    %v95 = vadd.f32 %v93, %v94
    %v96 = vrot.slane %v95, 1
    %v97 = vadd.f32 %v95, %v96
    %v98 = vsel %vm90, %v83, 0.0
    %v99 = vrot.slane %v98, 4
    %v100 = vadd.f32 %v98, %v99
    %v101 = vrot.slane %v100, 2
    %v102 = vadd.f32 %v100, %v101
    %v103 = vrot.slane %v102, 1
    %v104 = vadd.f32 %v102, %v103
    %v105 = vsel %vm90, %v84, 0.0
    %v106 = vrot.slane %v105, 4
    %v107 = vadd.f32 %v105, %v106
    %v108 = vrot.slane %v107, 2
    %v109 = vadd.f32 %v107, %v108
    %v110 = vrot.slane %v109, 1
    %v111 = vadd.f32 %v109, %v110
    %v112 = vsel %vm90, %v85, 0.0
    %v113 = vrot.slane %v112, 4
    %v114 = vadd.f32 %v112, %v113
    %v115 = vrot.slane %v114, 2
    %v116 = vadd.f32 %v114, %v115
    %v117 = vrot.slane %v116, 1
    %v118 = vadd.f32 %v116, %v117
    %v119 = vsel %vm90, %v86, 0.0
    %v120 = vrot.slane %v119, 4
    %v121 = vadd.f32 %v119, %v120
    %v122 = vrot.slane %v121, 2
    %v123 = vadd.f32 %v121, %v122
    %v124 = vrot.slane %v123, 1
    %v125 = vadd.f32 %v123, %v124
    %v126 = vsel %vm90, %v87, 0.0
    %v127 = vrot.slane %v126, 4
    %v128 = vadd.f32 %v126, %v127
    %v129 = vrot.slane %v128, 2
    %v130 = vadd.f32 %v128, %v129
    %v131 = vrot.slane %v130, 1
    %v132 = vadd.f32 %v130, %v131
    %v133 = vsel %vm90, %v88, 0.0
    %v134 = vrot.slane %v133, 4
    %v135 = vadd.f32 %v133, %v134
    %v136 = vrot.slane %v135, 2
    %v137 = vadd.f32 %v135, %v136
    %v138 = vrot.slane %v137, 1
    %v139 = vadd.f32 %v137, %v138
    %v140 = vsel %vm90, %v89, 0.0
    %v141 = vrot.slane %v140, 4
    %v142 = vadd.f32 %v140, %v141
    %v143 = vrot.slane %v142, 2
    %v144 = vadd.f32 %v142, %v143
    %v145 = vrot.slane %v144, 1
    %v146 = vadd.f32 %v144, %v145
    %v147 = vld [vmem:[%s3] sm:$0xff]
    %v148 = vld [vmem:[%s2] sm:$0xff]
    %150 = vset.pattern.permute.xlu0 0
    %151 = vperm.xlu0 %150, %v148
    %v152 = vpop.permute.xlu0 %151
    %vm162 = vcmask 1041409
    %v163 = vsel %vm162, %v104, %v97
    %vm164 = vcmask 1042434
    %v165 = vsel %vm164, %v111, %v163
    %vm166 = vcmask 1043459
    %v167 = vsel %vm166, %v118, %v165
    %vm168 = vcmask 1044484
    %v169 = vsel %vm168, %v125, %v167
    %vm170 = vcmask 1045509
    %v171 = vsel %vm170, %v132, %v169
    %vm172 = vcmask 1046534
    %v173 = vsel %vm172, %v139, %v171
    %vm174 = vcmask 1047559
    %v175 = vsel %vm174, %v146, %v173
    %v177 = vmul.f32 %v152, %v175
    %179 = vset.pattern.permute.xlu0 0
    %180 = vperm.xlu0 %179, %v147
    %v181 = vpop.permute.xlu0 %180
    %v183 = vadd.f32 %v181, %v177
    %v184 = vmul.f32 %v183, 1.442695
    %v185 = vpow.pop %v184
    %v186 = vadd.f32 %v185, 0.0
    %s187 = scalar_lea.vmem %s1, 32
    %v188 = vld [vmem:[%s187] sm:$0xf]
    %v189 = vld [vmem:[%s187 + $0x4] sm:$0xf]
    %v190 = vld [vmem:[%s187 + $0x8] sm:$0xf]
    %v191 = vld [vmem:[%s187 + $0xc] sm:$0xf]
    %v192 = vld [vmem:[%s187 + $0x10] sm:$0xf]
    %v193 = vld [vmem:[%s187 + $0x14] sm:$0xf]
    %v194 = vld [vmem:[%s187 + $0x18] sm:$0xf]
    %v195 = vld [vmem:[%s187 + $0x1c] sm:$0xf]
    %197 = vset.pattern.permute.xlu0 0
    %198 = vperm.xlu0 %197, %v188
    %v199 = vpop.permute.xlu0 %198
    %202 = vset.pattern.permute.xlu0 0
    %203 = vperm.xlu0 %202, %v189
    %v204 = vpop.permute.xlu0 %203
    %207 = vset.pattern.permute.xlu0 0
    %208 = vperm.xlu0 %207, %v190
    %v209 = vpop.permute.xlu0 %208
    %212 = vset.pattern.permute.xlu0 0
    %213 = vperm.xlu0 %212, %v191
    %v214 = vpop.permute.xlu0 %213
    %217 = vset.pattern.permute.xlu0 0
    %218 = vperm.xlu0 %217, %v192
    %v219 = vpop.permute.xlu0 %218
    %222 = vset.pattern.permute.xlu0 0
    %223 = vperm.xlu0 %222, %v193
    %v224 = vpop.permute.xlu0 %223
    %227 = vset.pattern.permute.xlu0 0
    %228 = vperm.xlu0 %227, %v194
    %v229 = vpop.permute.xlu0 %228
    %232 = vset.pattern.permute.xlu0 0
    %233 = vperm.xlu0 %232, %v195
    %v234 = vpop.permute.xlu0 %233
    %v236 = vsub.f32 %v18, %v199
    %v237 = vsub.f32 %v19, %v204
    %v238 = vsub.f32 %v20, %v209
    %v239 = vsub.f32 %v21, %v214
    %v240 = vsub.f32 %v22, %v219
    %v241 = vsub.f32 %v23, %v224
    %v242 = vsub.f32 %v24, %v229
    %v243 = vsub.f32 %v25, %v234
    %v244 = vmul.f32 %v236, %v236
    %v245 = vmul.f32 %v237, %v237
    %v246 = vmul.f32 %v238, %v238
    %v247 = vmul.f32 %v239, %v239
    %v248 = vmul.f32 %v240, %v240
    %v249 = vmul.f32 %v241, %v241
    %v250 = vmul.f32 %v242, %v242
    %v251 = vmul.f32 %v243, %v243
    %v252 = vsel %vm90, %v244, 0.0
    %v253 = vrot.slane %v252, 4
    %v254 = vadd.f32 %v252, %v253
    %v255 = vrot.slane %v254, 2
    %v256 = vadd.f32 %v254, %v255
    %v257 = vrot.slane %v256, 1
    %v258 = vadd.f32 %v256, %v257
    %v259 = vsel %vm90, %v245, 0.0
    %v260 = vrot.slane %v259, 4
    %v261 = vadd.f32 %v259, %v260
    %v262 = vrot.slane %v261, 2
    %v263 = vadd.f32 %v261, %v262
    %v264 = vrot.slane %v263, 1
    %v265 = vadd.f32 %v263, %v264
    %v266 = vsel %vm90, %v246, 0.0
    %v267 = vrot.slane %v266, 4
    %v268 = vadd.f32 %v266, %v267
    %v269 = vrot.slane %v268, 2
    %v270 = vadd.f32 %v268, %v269
    %v271 = vrot.slane %v270, 1
    %v272 = vadd.f32 %v270, %v271
    %v273 = vsel %vm90, %v247, 0.0
    %v274 = vrot.slane %v273, 4
    %v275 = vadd.f32 %v273, %v274
    %v276 = vrot.slane %v275, 2
    %v277 = vadd.f32 %v275, %v276
    %v278 = vrot.slane %v277, 1
    %v279 = vadd.f32 %v277, %v278
    %v280 = vsel %vm90, %v248, 0.0
    %v281 = vrot.slane %v280, 4
    %v282 = vadd.f32 %v280, %v281
    %v283 = vrot.slane %v282, 2
    %v284 = vadd.f32 %v282, %v283
    %v285 = vrot.slane %v284, 1
    %v286 = vadd.f32 %v284, %v285
    %v287 = vsel %vm90, %v249, 0.0
    %v288 = vrot.slane %v287, 4
    %v289 = vadd.f32 %v287, %v288
    %v290 = vrot.slane %v289, 2
    %v291 = vadd.f32 %v289, %v290
    %v292 = vrot.slane %v291, 1
    %v293 = vadd.f32 %v291, %v292
    %v294 = vsel %vm90, %v250, 0.0
    %v295 = vrot.slane %v294, 4
    %v296 = vadd.f32 %v294, %v295
    %v297 = vrot.slane %v296, 2
    %v298 = vadd.f32 %v296, %v297
    %v299 = vrot.slane %v298, 1
    %v300 = vadd.f32 %v298, %v299
    %v301 = vsel %vm90, %v251, 0.0
    %v302 = vrot.slane %v301, 4
    %v303 = vadd.f32 %v301, %v302
    %v304 = vrot.slane %v303, 2
    %v305 = vadd.f32 %v303, %v304
    %v306 = vrot.slane %v305, 1
    %v307 = vadd.f32 %v305, %v306
    %s308 = scalar_lea.vmem %s3, 8
    %v309 = vld [vmem:[%s308] sm:$0xff]
    %s310 = scalar_lea.vmem %s2, 8
    %v311 = vld [vmem:[%s310] sm:$0xff]
    %313 = vset.pattern.permute.xlu0 0
    %314 = vperm.xlu0 %313, %v311
    %v315 = vpop.permute.xlu0 %314
    %v325 = vsel %vm162, %v265, %v258
    %v326 = vsel %vm164, %v272, %v325
    %v327 = vsel %vm166, %v279, %v326
    %v328 = vsel %vm168, %v286, %v327
    %v329 = vsel %vm170, %v293, %v328
    %v330 = vsel %vm172, %v300, %v329
    %v331 = vsel %vm174, %v307, %v330
    %v333 = vmul.f32 %v315, %v331
    %335 = vset.pattern.permute.xlu0 0
    %336 = vperm.xlu0 %335, %v309
    %v337 = vpop.permute.xlu0 %336
    %v339 = vadd.f32 %v337, %v333
    %v340 = vmul.f32 %v339, 1.442695
    %v341 = vpow.pop %v340
    %v342 = vadd.f32 %v186, %v341
    %v343 = vmul.f32 %v342, 0.5
    %v344 = vlog2.pop %v343
    %v345 = vmul.f32 %v344, 0.6931472
    %vm346 = vcmask 130048
    %347 = vst.msk [vmem:[#allocation2] sm:$0xff] %vm346, %v345
    // Predicated region
    $region18: #{tpu_custom_call.1} parent=1 // pred_check
      _
    $region19: #{tpu_custom_call.1} parent=1 // pred_check_branch
      %349 = sbr.rel (0) target = $region21
    $region20: #{tpu_custom_call.1} parent=1 // pred_region
      %s351 = ssub.s32 128, 128
      %352 = vsyncadd [#allocation3], %s351
      %s354 = sshll.u32 [#allocation2], 4
      %s355 = int_to_ptr.vmem [resolvable:$true] %s354
      %357 = dma.vmem_to_hbm [thread:$0]  %s355, 128, %s4, [#allocation3]
    $region21: #{tpu_custom_call.1} parent=1 // pred_fallthru
      _
    // Predicated region
    $region22: #{tpu_custom_call.1} parent=1 // pred_check
      _
    $region23: #{tpu_custom_call.1} parent=1 // pred_check_branch
      %359 = sbr.rel (0) target = $region25
    $region24: #{tpu_custom_call.1} parent=1 // pred_region
      %360 = dma.done [#allocation3], 128
    $region25: #{tpu_custom_call.1} parent=1 // pred_fallthru
      _
    %361 = vsyncpa [#allocation3], 1

</llo_original>
